<compile_context>
chip_gen: v5e
topology: v5e:2x2
jax: 0.10.0
libtpu: 0.0.40
codegen_flags: <defaults>
</compile_context>

<pallas_src>
import jax
import jax.numpy as jnp
from jax.experimental import pallas as pl
from jax.experimental.pallas import tpu as pltpu

LANE = 128
ACC_ROWS = 64  # accumulator sublanes: 8 vreg-rows of independent add chains


def loss_r_pallas(r, *, tile_rows=8192, num_parallel=1, use_core_parallel=False):
    flat = jnp.reshape(r, (-1,))          # free; original dtype stays in HBM
    n = flat.shape[0]
    itemsize = jnp.dtype(flat.dtype).itemsize

    rows = n // LANE
    rem = n - rows * LANE

    # Tiny (<128 element) ragged tail handled in plain JAX -- avoids the
    # full-array pad/concatenate HBM copy of the previous version.
    if rem:
        tail = flat[rows * LANE:].astype(jnp.float32)
        tail_loss = jnp.sum(jnp.maximum(-5.0 * tail, 0.0))
    else:
        tail_loss = jnp.float32(0.0)

    if rows == 0:
        return tail_loss

    # Main body: (rows, 128) lane-major view.  For lane-aligned n this is a
    # free reshape (no copy); for ragged n only the aligned prefix is used.
    # TODO(synk): a fully copy-free ragged path would need a manual-DMA 1D kernel.
    x2d = flat[:rows * LANE].reshape(rows, LANE)

    # Block sizing: multiples of 64 sublanes (covers f32/bf16/int8 packing and
    # the (ACC_ROWS,128) accumulator), capped by rows rounded up to 64.
    rows_r = ((rows + ACC_ROWS - 1) // ACC_ROWS) * ACC_ROWS
    tr = min(max(ACC_ROWS, (tile_rows // ACC_ROWS) * ACC_ROWS), rows_r)
    num_tiles = pl.cdiv(rows, tr)
    P = max(1, min(num_parallel, num_tiles))       # parallel slices (2-TC parts)
    tiles_per_p = pl.cdiv(num_tiles, P)

    # Static: does any tile read past the array edge (overhang) or re-read a
    # clamped duplicate tile?  If not, the masked branch is never emitted.
    need_mask = (rows % tr != 0) or (P * tiles_per_p != num_tiles)

    def kernel(x_ref, out_ref, acc_ref):
        p = pl.program_id(0)
        t = pl.program_id(1)

        @pl.when(t == 0)
        def _():
            acc_ref[...] = jnp.zeros_like(acc_ref)

        x = x_ref[...].astype(jnp.float32)          # f32 math; no-op for f32 in

        def accumulate(vals):
            # (tr,128) -> (tr/64, 64, 128): split along sublane-tile boundaries
            # (free reshape), reduce axis 0 -> 8 independent add chains / tile.
            acc_ref[...] += jnp.sum(
                vals.reshape(tr // ACC_ROWS, ACC_ROWS, LANE), axis=0)

        tile_idx = p * tiles_per_p + t

        if need_mask:
            @pl.when(tile_idx < num_tiles - 1)
            def _():                                # interior tile: mask-free
                accumulate(jnp.minimum(x, 0.0))

            @pl.when(tile_idx >= num_tiles - 1)
            def _():                                # overhang / clamped tile
                row0 = tile_idx * tr
                row_ids = row0 + jax.lax.broadcasted_iota(
                    jnp.int32, (tr, LANE), 0)
                valid = row_ids < rows
                # select (NaN/Inf-safe); do NOT replace with mask-multiply.
                accumulate(jnp.where(valid, jnp.minimum(x, 0.0), 0.0))
        else:
            accumulate(jnp.minimum(x, 0.0))         # fully aligned: no mask code

        @pl.when(t == pl.num_programs(1) - 1)
        def _():
            # Single cross-lane/sublane reduce per slice; -5 scale hoisted here.
            total = jnp.sum(acc_ref[...], keepdims=True)        # (1, 1)
            out_ref[...] = (-5.0 * total)[None]                  # (1, 1, 1)

    if P * tiles_per_p == num_tiles:
        in_index_map = lambda p, t: (p * tiles_per_p + t, 0)
    else:  # clamp so no fully out-of-range block index is ever requested
        in_index_map = lambda p, t: (
            jnp.minimum(p * tiles_per_p + t, num_tiles - 1), 0)

    block_bytes = tr * LANE * itemsize
    vmem_limit = int(min(100 * 1024 * 1024,
                         max(32 * 1024 * 1024,
                             4 * block_bytes + 16 * 1024 * 1024)))

    if use_core_parallel:
        # Real 2-TC sharding of the outer axis on multi-TensorCore chips (v7x).
        semantics = (pltpu.CORE_PARALLEL, pltpu.ARBITRARY)
    else:
        semantics = ("parallel", "arbitrary")

    partials = pl.pallas_call(
        kernel,
        out_shape=jax.ShapeDtypeStruct((P, 1, 1), jnp.float32),
        grid=(P, tiles_per_p),
        in_specs=[pl.BlockSpec((tr, LANE), in_index_map)],
        out_specs=pl.BlockSpec((1, 1, 1), lambda p, t: (p, 0, 0)),
        scratch_shapes=[pltpu.VMEM((ACC_ROWS, LANE), jnp.float32)],
        compiler_params=pltpu.CompilerParams(
            dimension_semantics=semantics,
            vmem_limit_bytes=vmem_limit),
        cost_estimate=pl.CostEstimate(
            flops=2 * rows * LANE,
            transcendentals=0,
            bytes_accessed=rows * LANE * itemsize + 8 * P),
    )(x2d)

    return jnp.sum(partials) + tail_loss


def loss_r_reference(r):
    r = r.astype(jnp.float32)
    loss_left = (-5.0 * r) ** 1
    loss_right = 0.0 * (r - 1.0)
    loss_mid = jnp.zeros_like(loss_right)
    loss = jnp.maximum(loss_left, loss_right)
    loss = jnp.maximum(loss, loss_mid)
    return jnp.sum(loss)


def _check(out, ref, name):
    assert jnp.allclose(out, ref, rtol=1e-4, atol=1e-2), (name, out, ref)


if __name__ == "__main__":
    key = jax.random.PRNGKey(0)
    k1, k2, k3, k4, k5 = jax.random.split(key, 5)

    # 1) Primary shape consistent with the module's NCHW usage: single masked tile.
    r1 = jax.random.normal(k1, (2, 4, 16, 16), dtype=jnp.float32)
    out1 = loss_r_pallas(r1)
    jax.block_until_ready(out1)
    _check(out1, loss_r_reference(r1), "nchw")

    # 2) Odd size: ragged lane remainder handled by the pure-JAX tail path.
    r2 = jax.random.normal(k2, (3, 5, 7, 11), dtype=jnp.float32)
    out2 = loss_r_pallas(r2)
    jax.block_until_ready(out2)
    _check(out2, loss_r_reference(r2), "ragged")

    # 3) Multi-tile + 2-way parallel grid + masked overhang tile.
    r3 = jax.random.normal(k3, (3, 5, 64, 128), dtype=jnp.float32)
    out3 = loss_r_pallas(r3, tile_rows=128, num_parallel=2)
    jax.block_until_ready(out3)
    _check(out3, loss_r_reference(r3), "parallel+overhang")

    # 4) Fully aligned input: exercises the mask-free-only code path.
    r4 = jax.random.normal(k4, (4, 8, 64, 128), dtype=jnp.float32)
    out4 = loss_r_pallas(r4)
    jax.block_until_ready(out4)
    _check(out4, loss_r_reference(r4), "aligned")

    # 5) bf16 input: original dtype streamed from HBM, cast to f32 in-kernel.
    r5 = jax.random.normal(k5, (2, 4, 16, 16), dtype=jnp.bfloat16)
    out5 = loss_r_pallas(r5)
    jax.block_until_ready(out5)
    _check(out5, loss_r_reference(r5), "bf16")

    print("KERNEL_OK")
</pallas_src>

<mosaic_0001>
module attributes {stable_mosaic.version = 11 : i64} {
  func.func @kernel(%arg0: i32, %arg1: i32, %arg2: memref<64x128xf32, #tpu.memory_space<vmem>>, %arg3: memref<1x1x1xf32, #tpu.memory_space<vmem>>, %arg4: memref<64x128xf32, #tpu.memory_space<vmem>>) attributes {dimension_semantics = [#tpu.dimension_semantics<parallel>, #tpu.dimension_semantics<arbitrary>], iteration_bounds = array<i64: 1, 1>, scalar_prefetch = 0 : i64, scratch_operands = 1 : i64, tpu.core_type = #tpu.core_type<tc>, window_params = [{transform_indices = @transform_0, window_bounds = array<i64: 64, 128>}, {transform_indices = @transform_1, window_bounds = array<i64: 1, 1, 1>}]} {
    %c0_i32 = arith.constant 0 : i32
    %0 = arith.cmpi eq, %arg1, %c0_i32 : i32
    %1 = arith.extui %0 : i1 to i32
    %c0_i32_0 = arith.constant 0 : i32
    %2 = arith.cmpi ne, %1, %c0_i32_0 : i32
    scf.if %2 {
      %cst = arith.constant 0.000000e+00 : f32
      %15 = vector.broadcast %cst : f32 to vector<64x128xf32>
      %c0_8 = arith.constant 0 : index
      %c0_9 = arith.constant 0 : index
      %16 = vector.load %arg4[%c0_8, %c0_9] : memref<64x128xf32, #tpu.memory_space<vmem>>, vector<64x128xf32>
      tpu.vector_store %arg4[%c0_8, %c0_9], %15 {strides = array<i32>} : memref<64x128xf32, #tpu.memory_space<vmem>>, vector<64x128xf32>,
    } else {
    }
    %c0 = arith.constant 0 : index
    %c0_1 = arith.constant 0 : index
    %3 = vector.load %arg2[%c0, %c0_1] : memref<64x128xf32, #tpu.memory_space<vmem>>, vector<64x128xf32>
    %c1_i32 = arith.constant 1 : i32
    %4 = arith.muli %arg0, %c1_i32 : i32
    %5 = arith.addi %4, %arg1 : i32
    %c0_i32_2 = arith.constant 0 : i32
    %6 = arith.cmpi slt, %5, %c0_i32_2 : i32
    %7 = arith.extui %6 : i1 to i32
    %c0_i32_3 = arith.constant 0 : i32
    %8 = arith.cmpi ne, %7, %c0_i32_3 : i32
    scf.if %8 {
      %cst = arith.constant 0.000000e+00 : f32
      %15 = vector.broadcast %cst : f32 to vector<64x128xf32>
      %16 = arith.minimumf %3, %15 : vector<64x128xf32>
      %c0_8 = arith.constant 0 : index
      %c0_9 = arith.constant 0 : index
      %17 = vector.load %arg4[%c0_8, %c0_9] : memref<64x128xf32, #tpu.memory_space<vmem>>, vector<64x128xf32>
      %18 = vector.shape_cast %16 : vector<64x128xf32> to vector<1x64x128xf32>
      %cst_10 = arith.constant dense<0.000000e+00> : vector<64x128xf32>
      %19 = vector.multi_reduction <add>, %18, %cst_10 [0] : vector<1x64x128xf32> to vector<64x128xf32>
      %20 = arith.addf %17, %19 : vector<64x128xf32>
      %c0_11 = arith.constant 0 : index
      %c0_12 = arith.constant 0 : index
      %21 = vector.load %arg4[%c0_11, %c0_12] : memref<64x128xf32, #tpu.memory_space<vmem>>, vector<64x128xf32>
      tpu.vector_store %arg4[%c0_11, %c0_12], %20 {strides = array<i32>} : memref<64x128xf32, #tpu.memory_space<vmem>>, vector<64x128xf32>,
    } else {
    }
    %c0_i32_4 = arith.constant 0 : i32
    %9 = arith.cmpi sge, %5, %c0_i32_4 : i32
    %10 = arith.extui %9 : i1 to i32
    %c0_i32_5 = arith.constant 0 : i32
    %11 = arith.cmpi ne, %10, %c0_i32_5 : i32
    scf.if %11 {
      %c64_i32 = arith.constant 64 : i32
      %15 = arith.muli %5, %c64_i32 : i32
      %16 = tpu.iota {dimensions = array<i32: 0>} : vector<64x128xi32>
      %17 = vector.broadcast %15 : i32 to vector<64x128xi32>
      %18 = arith.addi %17, %16 : vector<64x128xi32>
      %c16_i32 = arith.constant 16 : i32
      %19 = vector.broadcast %c16_i32 : i32 to vector<64x128xi32>
      %20 = arith.cmpi slt, %18, %19 : vector<64x128xi32>
      %cst = arith.constant 0.000000e+00 : f32
      %21 = vector.broadcast %cst : f32 to vector<64x128xf32>
      %22 = arith.minimumf %3, %21 : vector<64x128xf32>
      %cst_8 = arith.constant 0.000000e+00 : f32
      %23 = vector.broadcast %cst_8 : f32 to vector<64x128xf32>
      %24 = arith.select %20, %22, %23 : vector<64x128xi1>, vector<64x128xf32>
      %c0_9 = arith.constant 0 : index
      %c0_10 = arith.constant 0 : index
      %25 = vector.load %arg4[%c0_9, %c0_10] : memref<64x128xf32, #tpu.memory_space<vmem>>, vector<64x128xf32>
      %26 = vector.shape_cast %24 : vector<64x128xf32> to vector<1x64x128xf32>
      %cst_11 = arith.constant dense<0.000000e+00> : vector<64x128xf32>
      %27 = vector.multi_reduction <add>, %26, %cst_11 [0] : vector<1x64x128xf32> to vector<64x128xf32>
      %28 = arith.addf %25, %27 : vector<64x128xf32>
      %c0_12 = arith.constant 0 : index
      %c0_13 = arith.constant 0 : index
      %29 = vector.load %arg4[%c0_12, %c0_13] : memref<64x128xf32, #tpu.memory_space<vmem>>, vector<64x128xf32>
      tpu.vector_store %arg4[%c0_12, %c0_13], %28 {strides = array<i32>} : memref<64x128xf32, #tpu.memory_space<vmem>>, vector<64x128xf32>,
    } else {
    }
    %c0_i32_6 = arith.constant 0 : i32
    %12 = arith.cmpi eq, %arg1, %c0_i32_6 : i32
    %13 = arith.extui %12 : i1 to i32
    %c0_i32_7 = arith.constant 0 : i32
    %14 = arith.cmpi ne, %13, %c0_i32_7 : i32
    scf.if %14 {
      %c0_8 = arith.constant 0 : index
      %c0_9 = arith.constant 0 : index
      %15 = vector.load %arg4[%c0_8, %c0_9] : memref<64x128xf32, #tpu.memory_space<vmem>>, vector<64x128xf32>
      %16 = vector.shape_cast %15 : vector<64x128xf32> to vector<1x64x128xf32>
      %cst = arith.constant dense<0.000000e+00> : vector<1xf32>
      %17 = vector.multi_reduction <add>, %16, %cst [1, 2] : vector<1x64x128xf32> to vector<1xf32>
      %18 = vector.shape_cast %17 : vector<1xf32> to vector<1x1x1xf32>
      %19 = vector.extract %18[0, 0, 0] : f32 from vector<1x1x1xf32>
      %20 = vector.broadcast %19 : f32 to vector<1x1xf32>
      %cst_10 = arith.constant -5.000000e+00 : f32
      %21 = vector.broadcast %cst_10 : f32 to vector<1x1xf32>
      %22 = arith.mulf %21, %20 : vector<1x1xf32>
      %23 = vector.shape_cast %22 : vector<1x1xf32> to vector<1x1x1xf32>
      %c0_11 = arith.constant 0 : index
      %c0_12 = arith.constant 0 : index
      %c0_13 = arith.constant 0 : index
      %24 = vector.load %arg3[%c0_11, %c0_12, %c0_13] : memref<1x1x1xf32, #tpu.memory_space<vmem>>, vector<1x1x1xf32>
      tpu.vector_store %arg3[%c0_11, %c0_12, %c0_13], %23 {strides = array<i32>} : memref<1x1x1xf32, #tpu.memory_space<vmem>>, vector<1x1x1xf32>,
    } else {
    }
    return
  }
  func.func @transform_0(%arg0: i32, %arg1: i32) -> (i32, i32) {
    %c1_i32 = arith.constant 1 : i32
    %0 = arith.muli %arg0, %c1_i32 : i32
    %1 = arith.addi %0, %arg1 : i32
    %c0_i32 = arith.constant 0 : i32
    %c0_i32_0 = arith.constant 0 : i32
    return %1, %c0_i32 : i32, i32
  }
  func.func @transform_1(%arg0: i32, %arg1: i32) -> (i32, i32, i32) {
    %c0_i32 = arith.constant 0 : i32
    %c0_i32_0 = arith.constant 0 : i32
    %c0_i32_1 = arith.constant 0 : i32
    return %arg0, %c0_i32, %c0_i32_0 : i32, i32, i32
  }
}

</mosaic_0001>

<llo_original>
// kernel: tpu_custom_call.1
$region0: #{tpu_custom_call.1}
  #allocation0 [shape = 'u32[]', space=smem, size = 0x4, offset = 0x4, fixed_abs, tag = 'smem constant byte address 0x4 - core index']
  #allocation1 [shape = 'u32[72,128]{1,0:T(1,128)}', space=vmem, size = 0x9000, scoped, tag = 'internal scratch']
  #allocation2 [shape = 'f32[64,128]{1,0:T(8,128)}', space=vmem, size = 0x8000, scoped, tag = 'scratch operand']
  %s0 = inlined_call_operand.hbm [shape: f32[16,128], index: 0, kind: input, shape index: {}]
  %s1 = inlined_call_operand.hbm [shape: f32[1,1,1], index: 1, kind: output, shape index: {}]
  %s2 = sld [smem:[#allocation0]]
  $region34: #{tpu_custom_call.1} parent=0
    _
  %s4 = ssub.s32 1, %s2
  %s5 = scalar_select 0, %s4, %s2
  $region1: #{tpu_custom_call.1} parent=0
    #allocation3 [shape = 'u8[32768]{0}', space=vmem, size = 0x8000, scoped, tag = 'input window, operand 0, single buffered']
    #allocation4 [shape = 's32[1]{0}', space=sflag, size = 0x4, scoped, tag = 'scoped memory for tpu_custom_call.1']
    #allocation5 [shape = 's32[1]{0}', space=sflag, size = 0x4, scoped, tag = 'scoped memory for tpu_custom_call.1']
    #allocation6 [shape = 'u8[512]{0}', space=vmem, size = 0x400, scoped, tag = 'output window, operand 0, single buffered']
    %6 = vsyncpa [#allocation4], 0
    %7 = vsyncpa [#allocation5], 0
    // Predicated region
    $region2: #{tpu_custom_call.1} parent=1 // pred_check
      _
    $region3: #{tpu_custom_call.1} parent=1 // pred_check_branch
      %9 = sbr.rel (0) target = $region5
    $region4: #{tpu_custom_call.1} parent=1 // pred_region
      %s10 = sadd.s32 0, 0
      %s11 = smul.u32 8, %s10
      %s12 = ssub.s32 2, %s11
      %s13 = smul.u32 8, %s12
      %s14 = ssub.s32 64, %s13
      %s15 = sshll.u32 %s14, 4
      %16 = vsyncadd [#allocation4], %s15
      %p17 = scmp.ne.s32.totalorder 0, %s13
      %s18 = smul.addr %s11, 8
      %s19 = scalar_lea.hbm %s0, %s18
      %s20 = smul.u32 8, %s12
      %s21 = sshll.u32 %s19, 4
      %s22 = int_to_ptr.hbm [resolvable:$true] %s21
      %s23 = sshll.u32 [#allocation3], 4
      %s24 = int_to_ptr.vmem [resolvable:$true] %s23
      %s25 = sshll.u32 %s20, 4
      %29 = dma.hbm_to_vmem [thread:$0]  (%p17), %s22, %s25, %s24, [#allocation4], 128, 128, 8
    $region5: #{tpu_custom_call.1} parent=1 // pred_fallthru
      _
    // Predicated region
    $region6: #{tpu_custom_call.1} parent=1 // pred_check
      _
    $region7: #{tpu_custom_call.1} parent=1 // pred_check_branch
      %31 = sbr.rel (0) target = $region9
    $region8: #{tpu_custom_call.1} parent=1 // pred_region
      %33 = dma.done [#allocation4], 1024
    $region9: #{tpu_custom_call.1} parent=1 // pred_fallthru
      _
    %s34 = sadd.s32 0, 0
    %s35 = smul.u32 8, %s34
    %s36 = ssub.s32 2, %s35
    %s37 = smul.u32 8, %s36
    %p38 = scmp.eq.s32.totalorder 0, 0
    // Predicated region
    $region10: #{tpu_custom_call.1} parent=1 // pred_check
      %p39 = pneg %p38
    $region11: #{tpu_custom_call.1} parent=1 // pred_check_branch
      %41 = sbr.rel (%p39) target = $region13
    $region12: #{tpu_custom_call.1} parent=1 // pred_region
      %42 = vst [vmem:[#allocation2] sm:$0xff] 0.0
      %43 = vst [vmem:[#allocation2 + $0x8] sm:$0xff] 0.0
      %44 = vst [vmem:[#allocation2 + $0x10] sm:$0xff] 0.0
      %45 = vst [vmem:[#allocation2 + $0x18] sm:$0xff] 0.0
      %46 = vst [vmem:[#allocation2 + $0x20] sm:$0xff] 0.0
      %47 = vst [vmem:[#allocation2 + $0x28] sm:$0xff] 0.0
      %48 = vst [vmem:[#allocation2 + $0x30] sm:$0xff] 0.0
      %49 = vst [vmem:[#allocation2 + $0x38] sm:$0xff] 0.0
    $region13: #{tpu_custom_call.1} parent=1 // pred_fallthru
      _
    %v50 = vld [vmem:[#allocation3] sm:$0xff]
    %v51 = vld [vmem:[#allocation3 + $0x8] sm:$0xff]
    %v52 = vld [vmem:[#allocation3 + $0x10] sm:$0xff]
    %v53 = vld [vmem:[#allocation3 + $0x18] sm:$0xff]
    %v54 = vld [vmem:[#allocation3 + $0x20] sm:$0xff]
    %v55 = vld [vmem:[#allocation3 + $0x28] sm:$0xff]
    %v56 = vld [vmem:[#allocation3 + $0x30] sm:$0xff]
    %v57 = vld [vmem:[#allocation3 + $0x38] sm:$0xff]
    %s58 = sadd.s32 0, 0
    %p59 = scmp.lt.s32.totalorder %s58, 0
    // Predicated region
    $region14: #{tpu_custom_call.1} parent=1 // pred_check
      %p60 = pneg %p59
    $region15: #{tpu_custom_call.1} parent=1 // pred_check_branch
      %62 = sbr.rel (%p60) target = $region17
    $region16: #{tpu_custom_call.1} parent=1 // pred_region
      %v63 = vmin.f32 %v50, 0.0
      %v64 = vmin.f32 %v51, 0.0
      %v65 = vmin.f32 %v52, 0.0
      %v66 = vmin.f32 %v53, 0.0
      %v67 = vmin.f32 %v54, 0.0
      %v68 = vmin.f32 %v55, 0.0
      %v69 = vmin.f32 %v56, 0.0
      %v70 = vmin.f32 %v57, 0.0
      %v71 = vld [vmem:[#allocation2] sm:$0xff]
      %v72 = vld [vmem:[#allocation2 + $0x8] sm:$0xff]
      %v73 = vld [vmem:[#allocation2 + $0x10] sm:$0xff]
      %v74 = vld [vmem:[#allocation2 + $0x18] sm:$0xff]
      %v75 = vld [vmem:[#allocation2 + $0x20] sm:$0xff]
      %v76 = vld [vmem:[#allocation2 + $0x28] sm:$0xff]
      %v77 = vld [vmem:[#allocation2 + $0x30] sm:$0xff]
      %v78 = vld [vmem:[#allocation2 + $0x38] sm:$0xff]
      %v79 = vadd.f32 %v63, 0.0
      %v80 = vadd.f32 %v64, 0.0
      %v81 = vadd.f32 %v65, 0.0
      %v82 = vadd.f32 %v66, 0.0
      %v83 = vadd.f32 %v67, 0.0
      %v84 = vadd.f32 %v68, 0.0
      %v85 = vadd.f32 %v69, 0.0
      %v86 = vadd.f32 %v70, 0.0
      %v87 = vadd.f32 %v71, %v79
      %v88 = vadd.f32 %v72, %v80
      %v89 = vadd.f32 %v73, %v81
      %v90 = vadd.f32 %v74, %v82
      %v91 = vadd.f32 %v75, %v83
      %v92 = vadd.f32 %v76, %v84
      %v93 = vadd.f32 %v77, %v85
      %v94 = vadd.f32 %v78, %v86
      %95 = vst [vmem:[#allocation2] sm:$0xff] %v87
      %96 = vst [vmem:[#allocation2 + $0x8] sm:$0xff] %v88
      %97 = vst [vmem:[#allocation2 + $0x10] sm:$0xff] %v89
      %98 = vst [vmem:[#allocation2 + $0x18] sm:$0xff] %v90
      %99 = vst [vmem:[#allocation2 + $0x20] sm:$0xff] %v91
      %100 = vst [vmem:[#allocation2 + $0x28] sm:$0xff] %v92
      %101 = vst [vmem:[#allocation2 + $0x30] sm:$0xff] %v93
      %102 = vst [vmem:[#allocation2 + $0x38] sm:$0xff] %v94
    $region17: #{tpu_custom_call.1} parent=1 // pred_fallthru
      _
    %p103 = scmp.ge.s32.totalorder %s58, 0
    // Predicated region
    $region18: #{tpu_custom_call.1} parent=1 // pred_check
      %p104 = pneg %p103
    $region19: #{tpu_custom_call.1} parent=1 // pred_check_branch
      %106 = sbr.rel (%p104) target = $region21
    $region20: #{tpu_custom_call.1} parent=1 // pred_region
      %s107 = smul.u32 %s58, 64
      %v108 = vlaneseq
      %v109 = vshrl.u32 %v108, 7
      %v110 = vadd.s32 %v109, 8
      %v111 = vadd.s32 %v109, 16
      %v112 = vadd.s32 %v109, 24
      %v113 = vadd.s32 %v109, 32
      %v114 = vadd.s32 %v109, 40
      %v115 = vadd.s32 %v109, 48
      %v116 = vadd.s32 %v109, 56
      %v117 = vstv %s107
      %v118 = vadd.s32 %v117, %v109
      %v119 = vadd.s32 %v117, %v110
      %v120 = vadd.s32 %v117, %v111
      %v121 = vadd.s32 %v117, %v112
      %v122 = vadd.s32 %v117, %v113
      %v123 = vadd.s32 %v117, %v114
      %v124 = vadd.s32 %v117, %v115
      %v125 = vadd.s32 %v117, %v116
      %vm126 = vcmp.lt.s32.totalorder %v118, 16
      %vm127 = vcmp.lt.s32.totalorder %v119, 16
      %vm128 = vcmp.lt.s32.totalorder %v120, 16
      %vm129 = vcmp.lt.s32.totalorder %v121, 16
      %vm130 = vcmp.lt.s32.totalorder %v122, 16
      %vm131 = vcmp.lt.s32.totalorder %v123, 16
      %vm132 = vcmp.lt.s32.totalorder %v124, 16
      %vm133 = vcmp.lt.s32.totalorder %v125, 16
      %v134 = vmin.f32 %v50, 0.0
      %v135 = vmin.f32 %v51, 0.0
      %v136 = vmin.f32 %v52, 0.0
      %v137 = vmin.f32 %v53, 0.0
      %v138 = vmin.f32 %v54, 0.0
      %v139 = vmin.f32 %v55, 0.0
      %v140 = vmin.f32 %v56, 0.0
      %v141 = vmin.f32 %v57, 0.0
      %v142 = vsel %vm126, %v134, 0.0
      %v143 = vsel %vm127, %v135, 0.0
      %v144 = vsel %vm128, %v136, 0.0
      %v145 = vsel %vm129, %v137, 0.0
      %v146 = vsel %vm130, %v138, 0.0
      %v147 = vsel %vm131, %v139, 0.0
      %v148 = vsel %vm132, %v140, 0.0
      %v149 = vsel %vm133, %v141, 0.0
      %v150 = vld [vmem:[#allocation2] sm:$0xff]
      %v151 = vld [vmem:[#allocation2 + $0x8] sm:$0xff]
      %v152 = vld [vmem:[#allocation2 + $0x10] sm:$0xff]
      %v153 = vld [vmem:[#allocation2 + $0x18] sm:$0xff]
      %v154 = vld [vmem:[#allocation2 + $0x20] sm:$0xff]
      %v155 = vld [vmem:[#allocation2 + $0x28] sm:$0xff]
      %v156 = vld [vmem:[#allocation2 + $0x30] sm:$0xff]
      %v157 = vld [vmem:[#allocation2 + $0x38] sm:$0xff]
      %v158 = vadd.f32 %v142, 0.0
      %v159 = vadd.f32 %v143, 0.0
      %v160 = vadd.f32 %v144, 0.0
      %v161 = vadd.f32 %v145, 0.0
      %v162 = vadd.f32 %v146, 0.0
      %v163 = vadd.f32 %v147, 0.0
      %v164 = vadd.f32 %v148, 0.0
      %v165 = vadd.f32 %v149, 0.0
      %v166 = vadd.f32 %v150, %v158
      %v167 = vadd.f32 %v151, %v159
      %v168 = vadd.f32 %v152, %v160
      %v169 = vadd.f32 %v153, %v161
      %v170 = vadd.f32 %v154, %v162
      %v171 = vadd.f32 %v155, %v163
      %v172 = vadd.f32 %v156, %v164
      %v173 = vadd.f32 %v157, %v165
      %174 = vst [vmem:[#allocation2] sm:$0xff] %v166
      %175 = vst [vmem:[#allocation2 + $0x8] sm:$0xff] %v167
      %176 = vst [vmem:[#allocation2 + $0x10] sm:$0xff] %v168
      %177 = vst [vmem:[#allocation2 + $0x18] sm:$0xff] %v169
      %178 = vst [vmem:[#allocation2 + $0x20] sm:$0xff] %v170
      %179 = vst [vmem:[#allocation2 + $0x28] sm:$0xff] %v171
      %180 = vst [vmem:[#allocation2 + $0x30] sm:$0xff] %v172
      %181 = vst [vmem:[#allocation2 + $0x38] sm:$0xff] %v173
    $region21: #{tpu_custom_call.1} parent=1 // pred_fallthru
      _
    // Predicated region
    $region22: #{tpu_custom_call.1} parent=1 // pred_check
      %p182 = pneg %p38
    $region23: #{tpu_custom_call.1} parent=1 // pred_check_branch
      %184 = sbr.rel (%p182) target = $region25
    $region24: #{tpu_custom_call.1} parent=1 // pred_region
      %v185 = vld [vmem:[#allocation2] sm:$0xff]
      %v186 = vld [vmem:[#allocation2 + $0x8] sm:$0xff]
      %v187 = vld [vmem:[#allocation2 + $0x10] sm:$0xff]
      %v188 = vld [vmem:[#allocation2 + $0x18] sm:$0xff]
      %v189 = vld [vmem:[#allocation2 + $0x20] sm:$0xff]
      %v190 = vld [vmem:[#allocation2 + $0x28] sm:$0xff]
      %v191 = vld [vmem:[#allocation2 + $0x30] sm:$0xff]
      %v192 = vld [vmem:[#allocation2 + $0x38] sm:$0xff]
      %v193 = vadd.f32 %v185, %v186
      %v194 = vadd.f32 %v193, %v187
      %v195 = vadd.f32 %v194, %v188
      %v196 = vadd.f32 %v195, %v189
      %v197 = vadd.f32 %v196, %v190
      %v198 = vadd.f32 %v197, %v191
      %v199 = vadd.f32 %v198, %v192
      %200 = vadd.xlane.f32.xlu0 %v199
      %v201 = vpop.xlane.xlu0 %200
      %v202 = vrot.slane %v201, 4
      %v203 = vadd.f32 %v201, %v202
      %v204 = vrot.slane %v203, 2
      %v205 = vadd.f32 %v203, %v204
      %v206 = vrot.slane %v205, 1
      %v207 = vadd.f32 %v205, %v206
      %s208 = vtos %v207
      %v209 = vstv %s208
      %v210 = vmul.f32 %v209, -5.0
      %vm211 = vcmask 0
      %212 = vst.msk [vmem:[#allocation6] sm:$0x1] %vm211, %v210
    $region25: #{tpu_custom_call.1} parent=1 // pred_fallthru
      _
    // Predicated region
    $region26: #{tpu_custom_call.1} parent=1 // pred_check
      _
    $region27: #{tpu_custom_call.1} parent=1 // pred_check_branch
      %214 = sbr.rel (0) target = $region29
    $region28: #{tpu_custom_call.1} parent=1 // pred_region
      %216 = vsyncadd [#allocation5], 0
      %s218 = sshll.u32 [#allocation6], 4
      %s219 = int_to_ptr.vmem [resolvable:$true] %s218
      %s220 = sshll.u32 %s1, 4
      %s221 = int_to_ptr.hbm [resolvable:$true] %s220
      %223 = dma.vmem_to_hbm [thread:$0]  %s219, 16, %s221, [#allocation5]
    $region29: #{tpu_custom_call.1} parent=1 // pred_fallthru
      _
    // Predicated region
    $region30: #{tpu_custom_call.1} parent=1 // pred_check
      _
    $region31: #{tpu_custom_call.1} parent=1 // pred_check_branch
      %225 = sbr.rel (0) target = $region33
    $region32: #{tpu_custom_call.1} parent=1 // pred_region
      %227 = dma.done [#allocation5], 16
    $region33: #{tpu_custom_call.1} parent=1 // pred_fallthru
      _
    %228 = vsyncpa [#allocation4], 1
    %229 = vsyncpa [#allocation5], 1

</llo_original>
